<compile_context>
chip_gen: v5e
topology: v5e:2x2
jax: 0.10.0
libtpu: 0.0.40
codegen_flags: <defaults>
</compile_context>

<pallas_src>
import functools

import jax
import jax.numpy as jnp
from jax.experimental import pallas as pl
from jax.experimental.pallas import tpu as pltpu


# ----------------------------------------------------------------------------
# Glue: bilinear interpolation with align_corners=True (matches F.interpolate)
# ----------------------------------------------------------------------------
def _interp_bilinear_align_corners(x, out_h, out_w):
    """x: (n, c, in_h, in_w) float32 -> (n, c, out_h, out_w)."""
    n, c, in_h, in_w = x.shape
    if (in_h, in_w) == (out_h, out_w):
        return x

    def coords(in_size, out_size):
        if out_size == 1:
            return jnp.zeros((1,), jnp.float32)
        return jnp.linspace(0.0, float(in_size - 1), out_size, dtype=jnp.float32)

    ys = coords(in_h, out_h)
    xs = coords(in_w, out_w)
    y0 = jnp.floor(ys).astype(jnp.int32)
    y1 = jnp.minimum(y0 + 1, in_h - 1)
    wy = ys - y0.astype(jnp.float32)
    x0 = jnp.floor(xs).astype(jnp.int32)
    x1 = jnp.minimum(x0 + 1, in_w - 1)
    wx = xs - x0.astype(jnp.float32)

    top = x[:, :, y0, :]
    bot = x[:, :, y1, :]
    rows = top * (1.0 - wy)[None, None, :, None] + bot * wy[None, None, :, None]
    left = rows[:, :, :, x0]
    right = rows[:, :, :, x1]
    return left * (1.0 - wx)[None, None, None, :] + right * wx[None, None, None, :]


# ----------------------------------------------------------------------------
# Pallas kernel: per-pixel MLP (1x1 convs) + attractor shift, channel-major
#   x_ref  : (Cin,    TILE_P)   pixels on the lane axis
#   b_ref  : (n_bins, TILE_P)
#   w1t    : (mlp_dim, Cin), b1: (mlp_dim, 1)
#   w2t    : (K, mlp_dim),   b2: (K, 1)         (only even output channels kept)
#   out_ref: (n_bins, TILE_P)
# ----------------------------------------------------------------------------
def _attractor_kernel(x_ref, b_ref, w1t_ref, b1_ref, w2t_ref, b2_ref, out_ref,
                      *, n_attractors, alpha, gamma, kind, attractor_type, eps):
    x = x_ref[...].astype(jnp.float32)                            # (Cin, TP)
    # Conv1x1 -> ReLU   (MXU matmul over channels, output lane-dense)
    h1 = jnp.dot(w1t_ref[...], x, preferred_element_type=jnp.float32) + b1_ref[...]
    h1 = jnp.maximum(h1, 0.0)                                     # (mlp, TP)
    # Conv1x1 -> ReLU ; only the even ("attractor point") channels are kept
    # (weights were pre-sliced in the wrapper), then + eps.
    a = jnp.dot(w2t_ref[...], h1, preferred_element_type=jnp.float32) + b2_ref[...]
    a = jnp.maximum(a, 0.0) + eps                                 # (K, TP)

    b_centers = b_ref[...]                                        # (n_bins, TP)
    delta = jnp.zeros_like(b_centers)
    for k in range(n_attractors):                                 # static unroll, K small
        dx = a[k:k + 1, :] - b_centers                            # sublane broadcast
        if attractor_type == 'exp':
            dc = jnp.exp(-alpha * jnp.abs(dx) ** gamma) * dx
        else:  # 'inv'
            if gamma == 2:
                denom = 1.0 + alpha * dx * dx
            else:
                denom = 1.0 + alpha * dx ** gamma
            dc = dx * pl.reciprocal(denom, approx=True)           # EUP, frees VALU/div
        delta = delta + dc
    if kind == 'mean':
        delta = delta * (1.0 / float(n_attractors))               # mul, not divide

    out_ref[...] = b_centers + delta


# ----------------------------------------------------------------------------
# Module wrapper
# ----------------------------------------------------------------------------
class AttractorLayerPallas:
    def __init__(self, in_features, n_bins, n_attractors=16, mlp_dim=128,
                 alpha=300, gamma=2, kind='sum', attractor_type='inv',
                 memory_efficient=False, seed=0, use_bf16=False):
        self.in_features = in_features
        self.n_bins = n_bins
        self.n_attractors = n_attractors
        self.mlp_dim = mlp_dim
        self.alpha = float(alpha)
        self.gamma = int(gamma)
        self.kind = kind
        self.attractor_type = attractor_type
        # Optional bf16 input/weight stream (recommended on v6e/v7x for the
        # memory-bound input read; loosens accuracy to ~1e-2 relative).
        self.use_bf16 = use_bf16

        # Deterministic parameter init (1x1 convs == per-pixel dense layers),
        # stored channel-major / pre-transposed for the (C, P) kernel layout.
        key = jax.random.PRNGKey(seed)
        k1, k2, k3, k4 = jax.random.split(key, 4)
        w1 = (jax.random.normal(k1, (in_features, mlp_dim), jnp.float32)
              * (1.0 / jnp.sqrt(in_features)))
        b1 = jax.random.normal(k2, (mlp_dim,), jnp.float32) * 0.01
        w2_full = (jax.random.normal(k3, (mlp_dim, n_attractors * 2), jnp.float32)
                   * (1.0 / jnp.sqrt(mlp_dim)))
        b2_full = jax.random.normal(k4, (n_attractors * 2,), jnp.float32) * 0.01
        # Channel layout after view(n, K, 2, h, w): attractor point k is channel 2k.
        # The odd channels never influence the output (normalization is discarded
        # in the reference code), so only the even output columns are kept.
        self.w1t = jnp.transpose(w1)                   # (mlp_dim, Cin)
        self.b1 = b1.reshape(mlp_dim, 1)               # (mlp_dim, 1)
        self.w2t = jnp.transpose(w2_full[:, ::2])      # (K, mlp_dim)
        self.b2 = b2_full[::2].reshape(n_attractors, 1)  # (K, 1)

    @staticmethod
    def _choose_tile(P):
        """Largest lane-dense tile that divides P when possible (no padding)."""
        for t in (2048, 1024, 512, 256, 128):
            if P % t == 0:
                return t, P
        # Ragged P: round the tile up to a multiple of 128 and pad (rare path).
        tile = min(1024, pl.cdiv(P, 128) * 128)
        return tile, pl.cdiv(P, tile) * tile

    def __call__(self, x, b_prev, h, w, prev_b_embedding=None, interpolate=True):
        # prev_b_embedding is interpolated in the reference code but never used
        # afterwards, so it is accepted and ignored here (same semantics).
        del prev_b_embedding, interpolate

        x = _interp_bilinear_align_corners(x.astype(jnp.float32), h, w)
        b_prev = _interp_bilinear_align_corners(b_prev.astype(jnp.float32), h, w)

        n = x.shape[0]
        P = h * w
        # Channel-major: NCHW is already (n, C, pixels) — reshape is free, no
        # transpose and no HBM pass.
        x_p = x.reshape(n, self.in_features, P)
        b_p = b_prev.reshape(n, self.n_bins, P)

        TILE_P, P_pad = self._choose_tile(P)
        if P_pad != P:
            # Padded tail computes garbage that is sliced off below.
            x_p = jnp.pad(x_p, ((0, 0), (0, 0), (0, P_pad - P)))
            b_p = jnp.pad(b_p, ((0, 0), (0, 0), (0, P_pad - P)))

        w1t, w2t = self.w1t, self.w2t
        if self.use_bf16:
            x_p = x_p.astype(jnp.bfloat16)
            w1t = w1t.astype(jnp.bfloat16)
            w2t = w2t.astype(jnp.bfloat16)

        kernel = functools.partial(
            _attractor_kernel,
            n_attractors=self.n_attractors, alpha=self.alpha, gamma=self.gamma,
            kind=self.kind, attractor_type=self.attractor_type, eps=1e-3)

        n_tiles = P_pad // TILE_P
        K = self.n_attractors

        # Cost estimate: two per-pixel matmuls + K*n_bins elementwise attractor.
        flops = n * P_pad * (2 * self.in_features * self.mlp_dim
                             + 2 * self.mlp_dim * K
                             + 6 * self.n_bins * K)
        transcendentals = n * P_pad * self.n_bins * K
        bytes_per_elem = 2 if self.use_bf16 else 4
        bytes_accessed = (n * P_pad * (bytes_per_elem * self.in_features
                                       + 4 * 2 * self.n_bins)
                          + bytes_per_elem * (w1t.size + w2t.size)
                          + 4 * (self.b1.size + self.b2.size))
        cost = pl.CostEstimate(flops=flops, transcendentals=transcendentals,
                               bytes_accessed=bytes_accessed)

        # VMEM budget: double-buffered blocks + compute temps; raise the scoped
        # limit only if the estimate is large (v5e default 16 MiB, v7x 32/64).
        vmem_est = 4 * TILE_P * (2 * (self.in_features + 2 * self.n_bins)
                                 + self.mlp_dim + K + 2 * self.n_bins)
        cp_kwargs = dict(dimension_semantics=("parallel", "parallel"))
        if vmem_est > 12 * 1024 * 1024:
            cp_kwargs["vmem_limit_bytes"] = int(min(2 * vmem_est, 48 * 1024 * 1024))

        out = pl.pallas_call(
            kernel,
            out_shape=jax.ShapeDtypeStruct((n, self.n_bins, P_pad), jnp.float32),
            grid=(n, n_tiles),
            in_specs=[
                pl.BlockSpec((None, self.in_features, TILE_P), lambda b, i: (b, 0, i)),
                pl.BlockSpec((None, self.n_bins, TILE_P), lambda b, i: (b, 0, i)),
                pl.BlockSpec((self.mlp_dim, self.in_features), lambda b, i: (0, 0)),
                pl.BlockSpec((self.mlp_dim, 1), lambda b, i: (0, 0)),
                pl.BlockSpec((K, self.mlp_dim), lambda b, i: (0, 0)),
                pl.BlockSpec((K, 1), lambda b, i: (0, 0)),
            ],
            out_specs=pl.BlockSpec((None, self.n_bins, TILE_P), lambda b, i: (b, 0, i)),
            compiler_params=pltpu.CompilerParams(**cp_kwargs),
            cost_estimate=cost,
        )(x_p, b_p, w1t, self.b1, w2t, self.b2)

        return out[:, :, :P].reshape(n, self.n_bins, h, w)   # NCHW, no transpose

    # Pure-JAX reference (mirrors the PyTorch forward) for correctness check.
    def reference(self, x, b_prev, h, w):
        hp = jax.lax.Precision.HIGHEST
        x = _interp_bilinear_align_corners(x.astype(jnp.float32), h, w)
        b_prev = _interp_bilinear_align_corners(b_prev.astype(jnp.float32), h, w)
        h1 = jnp.einsum('dc,nchw->ndhw', self.w1t, x, precision=hp) \
            + self.b1.reshape(1, -1, 1, 1)
        h1 = jnp.maximum(h1, 0.0)
        a = jnp.einsum('kd,ndhw->nkhw', self.w2t, h1, precision=hp) \
            + self.b2.reshape(1, -1, 1, 1)
        a = jnp.maximum(a, 0.0) + 1e-3                          # (n, K, h, w)
        b_c = b_prev                                            # (n, n_bins, h, w)
        dx = a[:, :, None, :, :] - b_c[:, None, :, :, :]
        if self.attractor_type == 'exp':
            dc = jnp.exp(-self.alpha * jnp.abs(dx) ** self.gamma) * dx
        else:
            dc = dx / (1.0 + self.alpha * dx ** self.gamma)
        red = jnp.mean if self.kind == 'mean' else jnp.sum
        return b_c + red(dc, axis=1)


if __name__ == "__main__":
    # Small, module-consistent shapes.
    n, in_features, n_bins, n_attractors, mlp_dim = 2, 8, 16, 8, 32
    h_in = w_in = 8          # incoming feature / bin map resolution
    h = w = 16               # target resolution after bilinear upsample

    key = jax.random.PRNGKey(0)
    kx, kb = jax.random.split(key)
    x = jax.random.normal(kx, (n, in_features, h_in, w_in), jnp.float32)
    b_prev = jax.nn.softplus(jax.random.normal(kb, (n, n_bins, h_in, w_in), jnp.float32))

    layer = AttractorLayerPallas(in_features, n_bins, n_attractors=n_attractors,
                                 mlp_dim=mlp_dim, alpha=300, gamma=2,
                                 kind='sum', attractor_type='inv', seed=0,
                                 use_bf16=False)

    out = layer(x, b_prev, h, w)
    out = jax.block_until_ready(out)

    ref = layer.reference(x, b_prev, h, w)
    assert out.shape == (n, n_bins, h, w), out.shape
    # approx-reciprocal (EUP) is ~2^-12 relative -> tolerance loosened vs 1e-5.
    assert jnp.allclose(out, ref, atol=2e-3, rtol=2e-3), \
        float(jnp.max(jnp.abs(out - ref)))

    print("KERNEL_OK")
</pallas_src>

<mosaic_0001>
module attributes {stable_mosaic.version = 11 : i64} {
  func.func @_attractor_kernel(%arg0: i32, %arg1: i32, %arg2: memref<1x8x256xf32, #tpu.memory_space<vmem>>, %arg3: memref<1x16x256xf32, #tpu.memory_space<vmem>>, %arg4: memref<32x8xf32, #tpu.memory_space<vmem>>, %arg5: memref<32x1xf32, #tpu.memory_space<vmem>>, %arg6: memref<8x32xf32, #tpu.memory_space<vmem>>, %arg7: memref<8x1xf32, #tpu.memory_space<vmem>>, %arg8: memref<1x16x256xf32, #tpu.memory_space<vmem>>) attributes {dimension_semantics = [#tpu.dimension_semantics<parallel>, #tpu.dimension_semantics<parallel>], iteration_bounds = array<i64: 2, 1>, scalar_prefetch = 0 : i64, scratch_operands = 0 : i64, tpu.core_type = #tpu.core_type<tc>, window_params = [{transform_indices = @transform_0, window_bounds = array<i64: 1, 8, 256>}, {transform_indices = @transform_1, window_bounds = array<i64: 1, 16, 256>}, {pipeline_mode = #tpu.pipeline_mode<synchronous>, transform_indices = @transform_2, window_bounds = array<i64: 32, 8>}, {pipeline_mode = #tpu.pipeline_mode<synchronous>, transform_indices = @transform_3, window_bounds = array<i64: 32, 1>}, {pipeline_mode = #tpu.pipeline_mode<synchronous>, transform_indices = @transform_4, window_bounds = array<i64: 8, 32>}, {pipeline_mode = #tpu.pipeline_mode<synchronous>, transform_indices = @transform_5, window_bounds = array<i64: 8, 1>}, {transform_indices = @transform_6, window_bounds = array<i64: 1, 16, 256>}]} {
    %c0 = arith.constant 0 : index
    %c0_0 = arith.constant 0 : index
    %c0_1 = arith.constant 0 : index
    %0 = vector.load %arg2[%c0, %c0_0, %c0_1] : memref<1x8x256xf32, #tpu.memory_space<vmem>>, vector<1x8x256xf32>
    %1 = vector.shape_cast %0 : vector<1x8x256xf32> to vector<8x256xf32>
    %c0_2 = arith.constant 0 : index
    %c0_3 = arith.constant 0 : index
    %2 = vector.load %arg4[%c0_2, %c0_3] : memref<32x8xf32, #tpu.memory_space<vmem>>, vector<32x8xf32>
    %cst = arith.constant dense<0.000000e+00> : vector<32x256xf32>
    %3 = tpu.matmul %2, %1, %cst {dimension_numbers = #tpu.dot_dimension_numbers<[1], [0], [0], [1], [0, 0, 1, 1], [], []>} : vector<32x8xf32>, vector<8x256xf32>, vector<32x256xf32> -> vector<32x256xf32>
    %c0_4 = arith.constant 0 : index
    %c0_5 = arith.constant 0 : index
    %4 = vector.load %arg5[%c0_4, %c0_5] : memref<32x1xf32, #tpu.memory_space<vmem>>, vector<32x1xf32>
    %5 = vector.broadcast %4 : vector<32x1xf32> to vector<32x256xf32>
    %6 = arith.addf %3, %5 : vector<32x256xf32>
    %cst_6 = arith.constant 0.000000e+00 : f32
    %7 = vector.broadcast %cst_6 : f32 to vector<32x256xf32>
    %8 = arith.maximumf %6, %7 : vector<32x256xf32>
    %c0_7 = arith.constant 0 : index
    %c0_8 = arith.constant 0 : index
    %9 = vector.load %arg6[%c0_7, %c0_8] : memref<8x32xf32, #tpu.memory_space<vmem>>, vector<8x32xf32>
    %cst_9 = arith.constant dense<0.000000e+00> : vector<8x256xf32>
    %10 = tpu.matmul %9, %8, %cst_9 {dimension_numbers = #tpu.dot_dimension_numbers<[1], [0], [0], [1], [0, 0, 1, 1], [], []>} : vector<8x32xf32>, vector<32x256xf32>, vector<8x256xf32> -> vector<8x256xf32>
    %c0_10 = arith.constant 0 : index
    %c0_11 = arith.constant 0 : index
    %11 = vector.load %arg7[%c0_10, %c0_11] : memref<8x1xf32, #tpu.memory_space<vmem>>, vector<8x1xf32>
    %12 = vector.broadcast %11 : vector<8x1xf32> to vector<8x256xf32>
    %13 = arith.addf %10, %12 : vector<8x256xf32>
    %cst_12 = arith.constant 0.000000e+00 : f32
    %14 = vector.broadcast %cst_12 : f32 to vector<8x256xf32>
    %15 = arith.maximumf %13, %14 : vector<8x256xf32>
    %cst_13 = arith.constant 1.000000e-03 : f32
    %16 = vector.broadcast %cst_13 : f32 to vector<8x256xf32>
    %17 = arith.addf %15, %16 : vector<8x256xf32>
    %c0_14 = arith.constant 0 : index
    %c0_15 = arith.constant 0 : index
    %c0_16 = arith.constant 0 : index
    %18 = vector.load %arg3[%c0_14, %c0_15, %c0_16] : memref<1x16x256xf32, #tpu.memory_space<vmem>>, vector<1x16x256xf32>
    %19 = vector.shape_cast %18 : vector<1x16x256xf32> to vector<16x256xf32>
    %cst_17 = arith.constant 0.000000e+00 : f32
    %20 = vector.broadcast %cst_17 : f32 to vector<16x256xf32>
    %21 = vector.extract_strided_slice %17 {offsets = [0, 0], sizes = [1, 256], strides = [1, 1]} : vector<8x256xf32> to vector<1x256xf32>
    %22 = vector.broadcast %21 : vector<1x256xf32> to vector<16x256xf32>
    %23 = arith.subf %22, %19 : vector<16x256xf32>
    %cst_18 = arith.constant 3.000000e+02 : f32
    %24 = vector.broadcast %cst_18 : f32 to vector<16x256xf32>
    %25 = arith.mulf %24, %23 : vector<16x256xf32>
    %26 = arith.mulf %25, %23 : vector<16x256xf32>
    %cst_19 = arith.constant 1.000000e+00 : f32
    %27 = vector.broadcast %cst_19 : f32 to vector<16x256xf32>
    %28 = arith.addf %27, %26 : vector<16x256xf32>
    %29 = tpu.reciprocal %28 {approx = true} : vector<16x256xf32> -> vector<16x256xf32>
    %30 = arith.mulf %23, %29 : vector<16x256xf32>
    %31 = arith.addf %20, %30 : vector<16x256xf32>
    %32 = vector.extract_strided_slice %17 {offsets = [1, 0], sizes = [1, 256], strides = [1, 1]} : vector<8x256xf32> to vector<1x256xf32>
    %33 = vector.broadcast %32 : vector<1x256xf32> to vector<16x256xf32>
    %34 = arith.subf %33, %19 : vector<16x256xf32>
    %cst_20 = arith.constant 3.000000e+02 : f32
    %35 = vector.broadcast %cst_20 : f32 to vector<16x256xf32>
    %36 = arith.mulf %35, %34 : vector<16x256xf32>
    %37 = arith.mulf %36, %34 : vector<16x256xf32>
    %cst_21 = arith.constant 1.000000e+00 : f32
    %38 = vector.broadcast %cst_21 : f32 to vector<16x256xf32>
    %39 = arith.addf %38, %37 : vector<16x256xf32>
    %40 = tpu.reciprocal %39 {approx = true} : vector<16x256xf32> -> vector<16x256xf32>
    %41 = arith.mulf %34, %40 : vector<16x256xf32>
    %42 = arith.addf %31, %41 : vector<16x256xf32>
    %43 = vector.extract_strided_slice %17 {offsets = [2, 0], sizes = [1, 256], strides = [1, 1]} : vector<8x256xf32> to vector<1x256xf32>
    %44 = vector.broadcast %43 : vector<1x256xf32> to vector<16x256xf32>
    %45 = arith.subf %44, %19 : vector<16x256xf32>
    %cst_22 = arith.constant 3.000000e+02 : f32
    %46 = vector.broadcast %cst_22 : f32 to vector<16x256xf32>
    %47 = arith.mulf %46, %45 : vector<16x256xf32>
    %48 = arith.mulf %47, %45 : vector<16x256xf32>
    %cst_23 = arith.constant 1.000000e+00 : f32
    %49 = vector.broadcast %cst_23 : f32 to vector<16x256xf32>
    %50 = arith.addf %49, %48 : vector<16x256xf32>
    %51 = tpu.reciprocal %50 {approx = true} : vector<16x256xf32> -> vector<16x256xf32>
    %52 = arith.mulf %45, %51 : vector<16x256xf32>
    %53 = arith.addf %42, %52 : vector<16x256xf32>
    %54 = vector.extract_strided_slice %17 {offsets = [3, 0], sizes = [1, 256], strides = [1, 1]} : vector<8x256xf32> to vector<1x256xf32>
    %55 = vector.broadcast %54 : vector<1x256xf32> to vector<16x256xf32>
    %56 = arith.subf %55, %19 : vector<16x256xf32>
    %cst_24 = arith.constant 3.000000e+02 : f32
    %57 = vector.broadcast %cst_24 : f32 to vector<16x256xf32>
    %58 = arith.mulf %57, %56 : vector<16x256xf32>
    %59 = arith.mulf %58, %56 : vector<16x256xf32>
    %cst_25 = arith.constant 1.000000e+00 : f32
    %60 = vector.broadcast %cst_25 : f32 to vector<16x256xf32>
    %61 = arith.addf %60, %59 : vector<16x256xf32>
    %62 = tpu.reciprocal %61 {approx = true} : vector<16x256xf32> -> vector<16x256xf32>
    %63 = arith.mulf %56, %62 : vector<16x256xf32>
    %64 = arith.addf %53, %63 : vector<16x256xf32>
    %65 = vector.extract_strided_slice %17 {offsets = [4, 0], sizes = [1, 256], strides = [1, 1]} : vector<8x256xf32> to vector<1x256xf32>
    %66 = vector.broadcast %65 : vector<1x256xf32> to vector<16x256xf32>
    %67 = arith.subf %66, %19 : vector<16x256xf32>
    %cst_26 = arith.constant 3.000000e+02 : f32
    %68 = vector.broadcast %cst_26 : f32 to vector<16x256xf32>
    %69 = arith.mulf %68, %67 : vector<16x256xf32>
    %70 = arith.mulf %69, %67 : vector<16x256xf32>
    %cst_27 = arith.constant 1.000000e+00 : f32
    %71 = vector.broadcast %cst_27 : f32 to vector<16x256xf32>
    %72 = arith.addf %71, %70 : vector<16x256xf32>
    %73 = tpu.reciprocal %72 {approx = true} : vector<16x256xf32> -> vector<16x256xf32>
    %74 = arith.mulf %67, %73 : vector<16x256xf32>
    %75 = arith.addf %64, %74 : vector<16x256xf32>
    %76 = vector.extract_strided_slice %17 {offsets = [5, 0], sizes = [1, 256], strides = [1, 1]} : vector<8x256xf32> to vector<1x256xf32>
    %77 = vector.broadcast %76 : vector<1x256xf32> to vector<16x256xf32>
    %78 = arith.subf %77, %19 : vector<16x256xf32>
    %cst_28 = arith.constant 3.000000e+02 : f32
    %79 = vector.broadcast %cst_28 : f32 to vector<16x256xf32>
    %80 = arith.mulf %79, %78 : vector<16x256xf32>
    %81 = arith.mulf %80, %78 : vector<16x256xf32>
    %cst_29 = arith.constant 1.000000e+00 : f32
    %82 = vector.broadcast %cst_29 : f32 to vector<16x256xf32>
    %83 = arith.addf %82, %81 : vector<16x256xf32>
    %84 = tpu.reciprocal %83 {approx = true} : vector<16x256xf32> -> vector<16x256xf32>
    %85 = arith.mulf %78, %84 : vector<16x256xf32>
    %86 = arith.addf %75, %85 : vector<16x256xf32>
    %87 = vector.extract_strided_slice %17 {offsets = [6, 0], sizes = [1, 256], strides = [1, 1]} : vector<8x256xf32> to vector<1x256xf32>
    %88 = vector.broadcast %87 : vector<1x256xf32> to vector<16x256xf32>
    %89 = arith.subf %88, %19 : vector<16x256xf32>
    %cst_30 = arith.constant 3.000000e+02 : f32
    %90 = vector.broadcast %cst_30 : f32 to vector<16x256xf32>
    %91 = arith.mulf %90, %89 : vector<16x256xf32>
    %92 = arith.mulf %91, %89 : vector<16x256xf32>
    %cst_31 = arith.constant 1.000000e+00 : f32
    %93 = vector.broadcast %cst_31 : f32 to vector<16x256xf32>
    %94 = arith.addf %93, %92 : vector<16x256xf32>
    %95 = tpu.reciprocal %94 {approx = true} : vector<16x256xf32> -> vector<16x256xf32>
    %96 = arith.mulf %89, %95 : vector<16x256xf32>
    %97 = arith.addf %86, %96 : vector<16x256xf32>
    %98 = vector.extract_strided_slice %17 {offsets = [7, 0], sizes = [1, 256], strides = [1, 1]} : vector<8x256xf32> to vector<1x256xf32>
    %99 = vector.broadcast %98 : vector<1x256xf32> to vector<16x256xf32>
    %100 = arith.subf %99, %19 : vector<16x256xf32>
    %cst_32 = arith.constant 3.000000e+02 : f32
    %101 = vector.broadcast %cst_32 : f32 to vector<16x256xf32>
    %102 = arith.mulf %101, %100 : vector<16x256xf32>
    %103 = arith.mulf %102, %100 : vector<16x256xf32>
    %cst_33 = arith.constant 1.000000e+00 : f32
    %104 = vector.broadcast %cst_33 : f32 to vector<16x256xf32>
    %105 = arith.addf %104, %103 : vector<16x256xf32>
    %106 = tpu.reciprocal %105 {approx = true} : vector<16x256xf32> -> vector<16x256xf32>
    %107 = arith.mulf %100, %106 : vector<16x256xf32>
    %108 = arith.addf %97, %107 : vector<16x256xf32>
    %109 = arith.addf %19, %108 : vector<16x256xf32>
    %c0_34 = arith.constant 0 : index
    %c0_35 = arith.constant 0 : index
    %c0_36 = arith.constant 0 : index
    %110 = vector.load %arg8[%c0_34, %c0_35, %c0_36] : memref<1x16x256xf32, #tpu.memory_space<vmem>>, vector<1x16x256xf32>
    %111 = vector.shape_cast %110 : vector<1x16x256xf32> to vector<16x256xf32>
    %112 = vector.shape_cast %109 : vector<16x256xf32> to vector<1x16x256xf32>
    tpu.vector_store %arg8[%c0_34, %c0_35, %c0_36], %112 {strides = array<i32>} : memref<1x16x256xf32, #tpu.memory_space<vmem>>, vector<1x16x256xf32>,
    return
  }
  func.func @transform_0(%arg0: i32, %arg1: i32) -> (i32, i32, i32) {
    %c0_i32 = arith.constant 0 : i32
    %c0_i32_0 = arith.constant 0 : i32
    return %arg0, %c0_i32, %arg1 : i32, i32, i32
  }
  func.func @transform_1(%arg0: i32, %arg1: i32) -> (i32, i32, i32) {
    %c0_i32 = arith.constant 0 : i32
    %c0_i32_0 = arith.constant 0 : i32
    return %arg0, %c0_i32, %arg1 : i32, i32, i32
  }
  func.func @transform_2(%arg0: i32, %arg1: i32) -> (i32, i32) {
    %c0_i32 = arith.constant 0 : i32
    %c0_i32_0 = arith.constant 0 : i32
    %c0_i32_1 = arith.constant 0 : i32
    return %c0_i32, %c0_i32_0 : i32, i32
  }
  func.func @transform_3(%arg0: i32, %arg1: i32) -> (i32, i32) {
    %c0_i32 = arith.constant 0 : i32
    %c0_i32_0 = arith.constant 0 : i32
    %c0_i32_1 = arith.constant 0 : i32
    return %c0_i32, %c0_i32_0 : i32, i32
  }
  func.func @transform_4(%arg0: i32, %arg1: i32) -> (i32, i32) {
    %c0_i32 = arith.constant 0 : i32
    %c0_i32_0 = arith.constant 0 : i32
    %c0_i32_1 = arith.constant 0 : i32
    return %c0_i32, %c0_i32_0 : i32, i32
  }
  func.func @transform_5(%arg0: i32, %arg1: i32) -> (i32, i32) {
    %c0_i32 = arith.constant 0 : i32
    %c0_i32_0 = arith.constant 0 : i32
    %c0_i32_1 = arith.constant 0 : i32
    return %c0_i32, %c0_i32_0 : i32, i32
  }
  func.func @transform_6(%arg0: i32, %arg1: i32) -> (i32, i32, i32) {
    %c0_i32 = arith.constant 0 : i32
    %c0_i32_0 = arith.constant 0 : i32
    return %arg0, %c0_i32, %arg1 : i32, i32, i32
  }
}

</mosaic_0001>

<llo_original>
// kernel: tpu_custom_call.1
$region0: #{tpu_custom_call.1}
  #allocation0 [shape = 'u32[]', space=smem, size = 0x4, offset = 0x4, fixed_abs, tag = 'smem constant byte address 0x4 - core index']
  #allocation1 [shape = 'u32[72,128]{1,0:T(1,128)}', space=vmem, size = 0x9000, scoped, tag = 'internal scratch']
  %s0 = inlined_call_operand.hbm [shape: f32[2,8,256], index: 0, kind: input, shape index: {}]
  %s1 = inlined_call_operand.vmem [shape: f32[2,16,256], index: 1, kind: input, shape index: {}]
  %s2 = inlined_call_operand.vmem [shape: f32[32,8], index: 2, kind: input, shape index: {}]
  %s3 = inlined_call_operand.vmem [shape: f32[32,1], index: 3, kind: input, shape index: {}]
  %s4 = inlined_call_operand.vmem [shape: f32[8,32], index: 4, kind: input, shape index: {}]
  %s5 = inlined_call_operand.vmem [shape: f32[8,1], index: 5, kind: input, shape index: {}]
  %s6 = inlined_call_operand.hbm [shape: f32[2,16,256], index: 6, kind: output, shape index: {}]
  %s7 = sld [smem:[#allocation0]]
  $region61: #{tpu_custom_call.1} parent=0
    _
  %s9 = ssub.s32 1, %s7
  %s10 = scalar_select 0, %s9, %s7
  $region1: #{tpu_custom_call.1} parent=0
    #allocation2 [shape = 'u8[16384]{0}', space=vmem, size = 0x4000, scoped, tag = 'input window, operand 0']
    #allocation3 [shape = 's32[2]{0}', space=sflag, size = 0x8, scoped, tag = 'scoped memory for tpu_custom_call.1']
    #allocation4 [shape = 's32[2]{0}', space=sflag, size = 0x8, scoped, tag = 'scoped memory for tpu_custom_call.1']
    #allocation5 [shape = 'u8[32768]{0}', space=vmem, size = 0x8000, scoped, tag = 'output window, operand 0']
    %11 = vsyncpa [#allocation3], 0
    %s12 = scalar_lea.sflag [#allocation3], 1
    %13 = vsyncpa %s12, 0
    %14 = vsyncpa [#allocation4], 0
    %s15 = scalar_lea.sflag [#allocation4], 1
    %16 = vsyncpa %s15, 0
    loop: start=0, step=1, limit=4
    $region2: #{tpu_custom_call.1} parent=1 // loop_pre_header
      _
    $region3: #{tpu_custom_call.1} parent=1 // loop_header
      %s18 = sphi 0, %s22
      %p19 = scmp.ge.s32.totalorder %s18, 4
      %s25 = sphi 0, %s37
      %s26 = sphi 0, %s33
      %s27 = sphi 0, %s25
      %s28 = sphi 0, %s26
      %s29 = sphi 0, %s27
      %s30 = sphi 0, %s28
      %s42 = sphi 0, %s44
      %s45 = sphi 0, %s42
      %s46 = sphi 0, %s45
      %s62 = sphi 0, %s46
      %s70 = sphi 0, %s72
      %s73 = sphi 0, %s70
      %s74 = sphi 0, %s73
      %s90 = sphi 0, %s74
      %s94 = sphi 0, %s94
      %s96 = sphi 0, %s94
      %s97 = sphi 0, %s96
      %s111 = sphi 0, %s97
      %s115 = sphi 0, %s115
      %s117 = sphi 0, %s115
      %s118 = sphi 0, %s117
      %s132 = sphi 0, %s118
      %s136 = sphi 0, %s136
      %s138 = sphi 0, %s136
      %s139 = sphi 0, %s138
      %s153 = sphi 0, %s139
      %s157 = sphi 0, %s157
      %s159 = sphi 0, %s157
      %s160 = sphi 0, %s159
      %s174 = sphi 0, %s160
      %s182 = sphi 0, %s184
      %s185 = sphi 0, %s182
      %s186 = sphi 0, %s185
      %s202 = sphi 0, %s186
    $region4: #{tpu_custom_call.1} parent=1 // loop_header_branch
      %21 = sbr.rel (%p19) target = $region8
    $region5: #{tpu_custom_call.1} parent=1 // loop_body
      %s23 = ssub.s32 %s18, 1
      %s24 = ssub.s32 %s18, 2
      %s31 = sadd.s32 1, %s26
      %p32 = scmp.ge.s32.totalorder %s31, 1
      %s33 = scalar_select %p32, 0, %s31
      %s34 = sadd.s32 1, %s25
      %s35 = scalar_select %p32, %s34, %s25
      %p36 = scmp.ge.s32.totalorder %s35, 2
      %s37 = scalar_select %p36, 0, %s35
      %s38 = ssub.s32 %s25, %s37
      %s39 = ssub.s32 %s26, %s33
      %s40 = sor.u32 %s38, %s39
      %p41 = scmp.eq.s32.totalorder %s40, 0
      %s43 = sadd.s32 %s42, 1
      %s44 = scalar_select %p41, %s42, %s43
      %p47 = pneg %p41
      %p48 = scmp.eq.s32.totalorder %s18, 1
      %p49 = por %p47, %p48
      %p50 = scmp.ne.s32.totalorder %s42, %s45
      %p51 = scmp.eq.s32.totalorder %s18, 0
      %p52 = por %p50, %p51
      %p53 = scmp.ne.s32.totalorder %s42, %s45
      %p54 = scmp.eq.s32.totalorder %s23, 1
      %p55 = por %p53, %p54
      %p56 = scmp.ne.s32.totalorder %s45, %s46
      %p57 = scmp.eq.s32.totalorder %s23, 0
      %p58 = por %p56, %p57
      %p59 = scmp.ne.s32.totalorder %s45, %s46
      %p60 = scmp.eq.s32.totalorder %s24, 1
      %p61 = por %p59, %p60
      %p63 = scmp.ne.s32.totalorder %s46, %s62
      %p64 = scmp.eq.s32.totalorder %s24, 0
      %p65 = por %p63, %p64
      %s66 = ssub.s32 %s25, %s37
      %s67 = ssub.s32 %s26, %s33
      %s68 = sor.u32 %s66, %s67
      %p69 = scmp.eq.s32.totalorder %s68, 0
      %s71 = sadd.s32 %s70, 1
      %s72 = scalar_select %p69, %s70, %s71
      %p75 = pneg %p69
      %p76 = scmp.eq.s32.totalorder %s18, 1
      %p77 = por %p75, %p76
      %p78 = scmp.ne.s32.totalorder %s70, %s73
      %p79 = scmp.eq.s32.totalorder %s18, 0
      %p80 = por %p78, %p79
      %p81 = scmp.ne.s32.totalorder %s70, %s73
      %p82 = scmp.eq.s32.totalorder %s23, 1
      %p83 = por %p81, %p82
      %p84 = scmp.ne.s32.totalorder %s73, %s74
      %p85 = scmp.eq.s32.totalorder %s23, 0
      %p86 = por %p84, %p85
      %p87 = scmp.ne.s32.totalorder %s73, %s74
      %p88 = scmp.eq.s32.totalorder %s24, 1
      %p89 = por %p87, %p88
      %p91 = scmp.ne.s32.totalorder %s74, %s90
      %p92 = scmp.eq.s32.totalorder %s24, 0
      %p93 = por %p91, %p92
      %s95 = sadd.s32 %s94, 1
      %p98 = scmp.eq.s32.totalorder %s18, 1
      %p99 = scmp.ne.s32.totalorder %s94, %s96
      %p100 = scmp.eq.s32.totalorder %s18, 0
      %p101 = por %p99, %p100
      %p102 = scmp.ne.s32.totalorder %s94, %s96
      %p103 = scmp.eq.s32.totalorder %s23, 1
      %p104 = por %p102, %p103
      %p105 = scmp.ne.s32.totalorder %s96, %s97
      %p106 = scmp.eq.s32.totalorder %s23, 0
      %p107 = por %p105, %p106
      %p108 = scmp.ne.s32.totalorder %s96, %s97
      %p109 = scmp.eq.s32.totalorder %s24, 1
      %p110 = por %p108, %p109
      %p112 = scmp.ne.s32.totalorder %s97, %s111
      %p113 = scmp.eq.s32.totalorder %s24, 0
      %p114 = por %p112, %p113
      %s116 = sadd.s32 %s115, 1
      %p119 = scmp.eq.s32.totalorder %s18, 1
      %p120 = scmp.ne.s32.totalorder %s115, %s117
      %p121 = scmp.eq.s32.totalorder %s18, 0
      %p122 = por %p120, %p121
      %p123 = scmp.ne.s32.totalorder %s115, %s117
      %p124 = scmp.eq.s32.totalorder %s23, 1
      %p125 = por %p123, %p124
      %p126 = scmp.ne.s32.totalorder %s117, %s118
      %p127 = scmp.eq.s32.totalorder %s23, 0
      %p128 = por %p126, %p127
      %p129 = scmp.ne.s32.totalorder %s117, %s118
      %p130 = scmp.eq.s32.totalorder %s24, 1
      %p131 = por %p129, %p130
      %p133 = scmp.ne.s32.totalorder %s118, %s132
      %p134 = scmp.eq.s32.totalorder %s24, 0
      %p135 = por %p133, %p134
      %s137 = sadd.s32 %s136, 1
      %p140 = scmp.eq.s32.totalorder %s18, 1
      %p141 = scmp.ne.s32.totalorder %s136, %s138
      %p142 = scmp.eq.s32.totalorder %s18, 0
      %p143 = por %p141, %p142
      %p144 = scmp.ne.s32.totalorder %s136, %s138
      %p145 = scmp.eq.s32.totalorder %s23, 1
      %p146 = por %p144, %p145
      %p147 = scmp.ne.s32.totalorder %s138, %s139
      %p148 = scmp.eq.s32.totalorder %s23, 0
      %p149 = por %p147, %p148
      %p150 = scmp.ne.s32.totalorder %s138, %s139
      %p151 = scmp.eq.s32.totalorder %s24, 1
      %p152 = por %p150, %p151
      %p154 = scmp.ne.s32.totalorder %s139, %s153
      %p155 = scmp.eq.s32.totalorder %s24, 0
      %p156 = por %p154, %p155
      %s158 = sadd.s32 %s157, 1
      %p161 = scmp.eq.s32.totalorder %s18, 1
      %p162 = scmp.ne.s32.totalorder %s157, %s159
      %p163 = scmp.eq.s32.totalorder %s18, 0
      %p164 = por %p162, %p163
      %p165 = scmp.ne.s32.totalorder %s157, %s159
      %p166 = scmp.eq.s32.totalorder %s23, 1
      %p167 = por %p165, %p166
      %p168 = scmp.ne.s32.totalorder %s159, %s160
      %p169 = scmp.eq.s32.totalorder %s23, 0
      %p170 = por %p168, %p169
      %p171 = scmp.ne.s32.totalorder %s159, %s160
      %p172 = scmp.eq.s32.totalorder %s24, 1
      %p173 = por %p171, %p172
      %p175 = scmp.ne.s32.totalorder %s160, %s174
      %p176 = scmp.eq.s32.totalorder %s24, 0
      %p177 = por %p175, %p176
      %s178 = ssub.s32 %s25, %s37
      %s179 = ssub.s32 %s26, %s33
      %s180 = sor.u32 %s178, %s179
      %p181 = scmp.eq.s32.totalorder %s180, 0
      %s183 = sadd.s32 %s182, 1
      %s184 = scalar_select %p181, %s182, %s183
      %p187 = pneg %p181
      %p188 = scmp.eq.s32.totalorder %s18, 1
      %p189 = por %p187, %p188
      %p190 = scmp.ne.s32.totalorder %s182, %s185
      %p191 = scmp.eq.s32.totalorder %s18, 0
      %p192 = por %p190, %p191
      %p193 = scmp.ne.s32.totalorder %s182, %s185
      %p194 = scmp.eq.s32.totalorder %s23, 1
      %p195 = por %p193, %p194
      %p196 = scmp.ne.s32.totalorder %s185, %s186
      %p197 = scmp.eq.s32.totalorder %s23, 0
      %p198 = por %p196, %p197
      %p199 = scmp.ne.s32.totalorder %s185, %s186
      %p200 = scmp.eq.s32.totalorder %s24, 1
      %p201 = por %p199, %p200
      %p203 = scmp.ne.s32.totalorder %s186, %s202
      %p204 = scmp.eq.s32.totalorder %s24, 0
      %p205 = por %p203, %p204
      %p206 = scmp.le.s32.totalorder 1, %s18
      %p207 = scmp.lt.s32.totalorder %s18, 3
      %p208 = pnand %p206, %p207
      %p209 = pneg %p208
      // Predicated region
      $region9: #{tpu_custom_call.1} parent=5 // pred_check
        _
      $region10: #{tpu_custom_call.1} parent=5 // pred_check_branch
        %211 = sbr.rel (%p208) target = $region12
      $region11: #{tpu_custom_call.1} parent=5 // pred_region
        %s212 = ssub.s32 %s18, 1
        // Predicated region
        $region13: #{tpu_custom_call.1} parent=11 // pred_check
          %p213 = pneg %p107
        $region14: #{tpu_custom_call.1} parent=11 // pred_check_branch
          %215 = sbr.rel (%p213) target = $region16
        $region15: #{tpu_custom_call.1} parent=11 // pred_region
          _
        $region16: #{tpu_custom_call.1} parent=11 // pred_fallthru
          _
        // Predicated region
        $region17: #{tpu_custom_call.1} parent=11 // pred_check
          %p216 = pneg %p128
        $region18: #{tpu_custom_call.1} parent=11 // pred_check_branch
          %218 = sbr.rel (%p216) target = $region20
        $region19: #{tpu_custom_call.1} parent=11 // pred_region
          _
        $region20: #{tpu_custom_call.1} parent=11 // pred_fallthru
          _
        // Predicated region
        $region21: #{tpu_custom_call.1} parent=11 // pred_check
          %p219 = pneg %p149
        $region22: #{tpu_custom_call.1} parent=11 // pred_check_branch
          %221 = sbr.rel (%p219) target = $region24
        $region23: #{tpu_custom_call.1} parent=11 // pred_region
          _
        $region24: #{tpu_custom_call.1} parent=11 // pred_fallthru
          _
        // Predicated region
        $region25: #{tpu_custom_call.1} parent=11 // pred_check
          %p222 = pneg %p170
        $region26: #{tpu_custom_call.1} parent=11 // pred_check_branch
          %224 = sbr.rel (%p222) target = $region28
        $region27: #{tpu_custom_call.1} parent=11 // pred_region
          _
        $region28: #{tpu_custom_call.1} parent=11 // pred_fallthru
          _
      $region12: #{tpu_custom_call.1} parent=5 // pred_fallthru
        _
      %p225 = scmp.lt.s32.totalorder %s18, 2
      // Predicated region
      $region29: #{tpu_custom_call.1} parent=5 // pred_check
        %p226 = pneg %p225
      $region30: #{tpu_custom_call.1} parent=5 // pred_check_branch
        %228 = sbr.rel (%p226) target = $region32
      $region31: #{tpu_custom_call.1} parent=5 // pred_region
        // Predicated region
        $region33: #{tpu_custom_call.1} parent=31 // pred_check
          %p229 = pneg %p52
        $region34: #{tpu_custom_call.1} parent=31 // pred_check_branch
          %231 = sbr.rel (%p229) target = $region36
        $region35: #{tpu_custom_call.1} parent=31 // pred_region
          %s232 = sand.u32 %s42, 1
          %s233 = scalar_lea.sflag [#allocation3], %s232
          %s234 = sand.u32 %s42, 1
          %s235 = smul.addr %s234, 16
          %s236 = scalar_lea.vmem [#allocation2], %s235
          %s237 = smul.u32 2, %s26
          %239 = vsyncadd %s233, 0
          %s240 = smul.addr %s25, 2
          %s241 = sadd.s32 %s237, %s240
          %s242 = smul.addr %s241, 8
          %s243 = scalar_lea.hbm %s0, %s242
          %s245 = sshll.u32 %s243, 4
          %s246 = int_to_ptr.hbm [resolvable:$true] %s245
          %s247 = sshll.u32 %s236, 4
          %s248 = int_to_ptr.vmem [resolvable:$true] %s247
          %250 = dma.hbm_to_vmem [thread:$0]  %s246, 256, %s248, %s233
        $region36: #{tpu_custom_call.1} parent=31 // pred_fallthru
          _
        // Predicated region
        $region37: #{tpu_custom_call.1} parent=31 // pred_check
          %p251 = pneg %p80
        $region38: #{tpu_custom_call.1} parent=31 // pred_check_branch
          %253 = sbr.rel (%p251) target = $region40
        $region39: #{tpu_custom_call.1} parent=31 // pred_region
          %s254 = smul.u32 2, %s26
          %p255 = scmp.lt.s32.totalorder %s25, 1
          %s256 = scalar_select %p255, %s25, 1
          %p257 = scmp.lt.s32.totalorder %s254, 1
          %s258 = scalar_select %p257, %s254, 1
          %s259 = smul.addr %s256, 4
          %s260 = sadd.s32 %s258, %s259
          %s261 = smul.addr %s260, 8
          %s262 = scalar_lea.vmem %s1, %s261
          %s263 = smul.u32 2, %s26
        $region40: #{tpu_custom_call.1} parent=31 // pred_fallthru
          _
      $region32: #{tpu_custom_call.1} parent=5 // pred_fallthru
        _
      %p264 = scmp.le.s32.totalorder 1, %s18
      %p265 = scmp.lt.s32.totalorder %s18, 3
      %p266 = pnand %p264, %p265
      %p267 = pneg %p266
      // Predicated region
      $region41: #{tpu_custom_call.1} parent=5 // pred_check
        _
      $region42: #{tpu_custom_call.1} parent=5 // pred_check_branch
        %269 = sbr.rel (%p266) target = $region44
      $region43: #{tpu_custom_call.1} parent=5 // pred_region
        %s270 = ssub.s32 %s18, 1
        %s271 = sand.u32 %s45, 1
        %s272 = scalar_lea.sflag [#allocation3], %s271
        %s273 = sand.u32 %s45, 1
        %s274 = smul.addr %s273, 16
        %s275 = scalar_lea.vmem [#allocation2], %s274
        // Predicated region
        $region45: #{tpu_custom_call.1} parent=43 // pred_check
          %p276 = pneg %p58
        $region46: #{tpu_custom_call.1} parent=43 // pred_check_branch
          %278 = sbr.rel (%p276) target = $region48
        $region47: #{tpu_custom_call.1} parent=43 // pred_region
          %280 = dma.done %s272, 256
        $region48: #{tpu_custom_call.1} parent=43 // pred_fallthru
          _
        %s281 = sand.u32 %s45, 1
        %s282 = scalar_lea.sflag [#allocation3], %s281
        %s283 = sand.u32 %s45, 1
        %s284 = smul.addr %s283, 16
        %s285 = scalar_lea.vmem [#allocation2], %s284
        %p286 = pneg %p58
        %p287 = pneg %p55
        %s288 = smul.u32 2, %s28
        %p289 = scmp.lt.s32.totalorder %s27, 1
        %s290 = scalar_select %p289, %s27, 1
        %p291 = scmp.lt.s32.totalorder %s288, 1
        %s292 = scalar_select %p291, %s288, 1
        %s293 = smul.addr %s290, 4
        %s294 = sadd.s32 %s292, %s293
        %s295 = smul.addr %s294, 8
        %s296 = scalar_lea.vmem %s1, %s295
        %p297 = pneg %p86
        %p298 = pneg %p83
        %p299 = pneg %p107
        %p300 = pneg %p104
        %p301 = pneg %p128
        %p302 = pneg %p125
        %p303 = pneg %p149
        %p304 = pneg %p146
        %p305 = pneg %p170
        %p306 = pneg %p167
        %p307 = pneg %p198
        %p308 = pneg %p195
        %s309 = sand.u32 %s185, 1
        %s310 = scalar_lea.sflag [#allocation4], %s309
        %s311 = sand.u32 %s185, 1
        %s312 = smul.addr %s311, 32
        %s313 = scalar_lea.vmem [#allocation5], %s312
        %s314 = smul.u32 2, %s28
        %s315 = smul.u32 2, %s28
        %p316 = scmp.lt.s32.totalorder %s27, 1
        %s317 = scalar_select %p316, %s27, 1
        %p318 = scmp.lt.s32.totalorder %s315, 1
        %s319 = scalar_select %p318, %s315, 1
        %s320 = smul.addr %s317, 4
        %s321 = sadd.s32 %s319, %s320
        %s322 = smul.addr %s321, 8
        %s323 = scalar_lea.vmem %s1, %s322
        %s324 = smul.u32 2, %s28
        %s325 = smul.u32 2, %s28
        %v326 = vld [vmem:[%s275] sm:$0xff]
        %v327 = vld [vmem:[%s275 + $0x8] sm:$0xff]
        %v328 = vld [vmem:[%s2] sm:$0xff]
        %v329 = vld [vmem:[%s2 + $0x8] sm:$0xff]
        %v330 = vld [vmem:[%s2 + $0x10] sm:$0xff]
        %v331 = vld [vmem:[%s2 + $0x18] sm:$0xff]
        %v332 = vld [vmem:[%s3] sm:$0xff]
        %v333 = vld [vmem:[%s3 + $0x8] sm:$0xff]
        %v334 = vld [vmem:[%s3 + $0x10] sm:$0xff]
        %v335 = vld [vmem:[%s3 + $0x18] sm:$0xff]
        %337 = vset.pattern.permute.xlu0 0
        %338 = vperm.xlu0 %337, %v332
        %v339 = vpop.permute.xlu0 %338
        %342 = vset.pattern.permute.xlu0 0
        %343 = vperm.xlu0 %342, %v333
        %v344 = vpop.permute.xlu0 %343
        %347 = vset.pattern.permute.xlu0 0
        %348 = vperm.xlu0 %347, %v334
        %v349 = vpop.permute.xlu0 %348
        %352 = vset.pattern.permute.xlu0 0
        %353 = vperm.xlu0 %352, %v335
        %v354 = vpop.permute.xlu0 %353
        %vm356 = vcmask 64512
        %v358 = vsel %vm356, %v328, 0
        %v361 = vsel %vm356, %v329, 0
        %v364 = vsel %vm356, %v330, 0
        %v367 = vsel %vm356, %v331, 0
        %369 = vmatpush.msra.mxu0 0.0
        %370 = vmatpush.msra.mxu0 0.0
        %371 = vmatpush.msra.mxu0 0.0
        %372 = vmatpush.msra.mxu0 0.0
        %373 = vmatpush.msra.mxu0 0.0
        %374 = vmatpush.msra.mxu0 0.0
        %375 = vmatpush.msra.mxu0 0.0
        %376 = vmatpush.msra.mxu0 0.0
        %377 = vmatpush.msra.mxu0 0.0
        %378 = vmatpush.msra.mxu0 0.0
        %379 = vmatpush.msra.mxu0 0.0
        %380 = vmatpush.msra.mxu0 0.0
        %381 = vmatpush.msra.mxu0 0.0
        %382 = vmatpush.msra.mxu0 0.0
        %383 = vmatpush.msra.mxu0 0.0
        %384 = vmatpush.msra.mxu0 %v326
        %385 = vmatmul.f32.gmra.mxu0 %v358
        %v386 = vpop.f32.mrf.mxu0
        %v387 = vadd.f32 %v339, %v386
        %388 = vmatmul.f32.gmra.mxu0 %v361
        %v389 = vpop.f32.mrf.mxu0
        %v390 = vadd.f32 %v344, %v389
        %391 = vmatmul.f32.gmra.mxu0 %v364
        %v392 = vpop.f32.mrf.mxu0
        %v393 = vadd.f32 %v349, %v392
        %394 = vmatmul.f32.gmra.mxu0 %v367
        %v395 = vpop.f32.mrf.mxu0
        %v396 = vadd.f32 %v354, %v395
        %397 = vdwg.mxu0
        %398 = vmatpush.msra.mxu0 0.0
        %399 = vmatpush.msra.mxu0 0.0
        %400 = vmatpush.msra.mxu0 0.0
        %401 = vmatpush.msra.mxu0 0.0
        %402 = vmatpush.msra.mxu0 0.0
        %403 = vmatpush.msra.mxu0 0.0
        %404 = vmatpush.msra.mxu0 0.0
        %405 = vmatpush.msra.mxu0 0.0
        %406 = vmatpush.msra.mxu0 0.0
        %407 = vmatpush.msra.mxu0 0.0
        %408 = vmatpush.msra.mxu0 0.0
        %409 = vmatpush.msra.mxu0 0.0
        %410 = vmatpush.msra.mxu0 0.0
        %411 = vmatpush.msra.mxu0 0.0
        %412 = vmatpush.msra.mxu0 0.0
        %413 = vmatpush.msra.mxu0 %v327
        %414 = vmatmul.f32.gmra.mxu0 %v358
        %v415 = vpop.f32.mrf.mxu0
        %v416 = vadd.f32 %v339, %v415
        %417 = vmatmul.f32.gmra.mxu0 %v361
        %v418 = vpop.f32.mrf.mxu0
        %v419 = vadd.f32 %v344, %v418
        %420 = vmatmul.f32.gmra.mxu0 %v364
        %v421 = vpop.f32.mrf.mxu0
        %v422 = vadd.f32 %v349, %v421
        %423 = vmatmul.f32.gmra.mxu0 %v367
        %v424 = vpop.f32.mrf.mxu0
        %v425 = vadd.f32 %v354, %v424
        %426 = vdwg.mxu0
        %v427 = vmax.f32 %v387, 0.0
        %v428 = vmax.f32 %v416, 0.0
        %v429 = vmax.f32 %v390, 0.0
        %v430 = vmax.f32 %v419, 0.0
        %v431 = vmax.f32 %v393, 0.0
        %v432 = vmax.f32 %v422, 0.0
        %v433 = vmax.f32 %v396, 0.0
        %v434 = vmax.f32 %v425, 0.0
        %v435 = vld [vmem:[%s4] sm:$0xff]
        %v436 = vld [vmem:[%s5] sm:$0xff]
        %438 = vset.pattern.permute.xlu0 0
        %439 = vperm.xlu0 %438, %v436
        %v440 = vpop.permute.xlu0 %439
        %vm442 = vcmask 261120
        %v444 = vsel %vm442, %v435, 0
        %446 = vmatpush.msra.mxu0 0.0
        %447 = vmatpush.msra.mxu0 0.0
        %448 = vmatpush.msra.mxu0 0.0
        %449 = vmatpush.msra.mxu0 0.0
        %450 = vmatpush.msra.mxu0 0.0
        %451 = vmatpush.msra.mxu0 0.0
        %452 = vmatpush.msra.mxu0 0.0
        %453 = vmatpush.msra.mxu0 0.0
        %454 = vmatpush.msra.mxu0 0.0
        %455 = vmatpush.msra.mxu0 0.0
        %456 = vmatpush.msra.mxu0 0.0
        %457 = vmatpush.msra.mxu0 0.0
        %458 = vmatpush.msra.mxu0 %v433
        %459 = vmatpush.msra.mxu0 %v431
        %460 = vmatpush.msra.mxu0 %v429
        %461 = vmatpush.msra.mxu0 %v427
        %462 = vmatmul.f32.gmra.mxu0 %v444
        %v463 = vpop.f32.mrf.mxu0
        %v464 = vadd.f32 %v440, %v463
        %465 = vdwg.mxu0
        %466 = vmatpush.msra.mxu0 0.0
        %467 = vmatpush.msra.mxu0 0.0
        %468 = vmatpush.msra.mxu0 0.0
        %469 = vmatpush.msra.mxu0 0.0
        %470 = vmatpush.msra.mxu0 0.0
        %471 = vmatpush.msra.mxu0 0.0
        %472 = vmatpush.msra.mxu0 0.0
        %473 = vmatpush.msra.mxu0 0.0
        %474 = vmatpush.msra.mxu0 0.0
        %475 = vmatpush.msra.mxu0 0.0
        %476 = vmatpush.msra.mxu0 0.0
        %477 = vmatpush.msra.mxu0 0.0
        %478 = vmatpush.msra.mxu0 %v434
        %479 = vmatpush.msra.mxu0 %v432
        %480 = vmatpush.msra.mxu0 %v430
        %481 = vmatpush.msra.mxu0 %v428
        %482 = vmatmul.f32.gmra.mxu0 %v444
        %v483 = vpop.f32.mrf.mxu0
        %v484 = vadd.f32 %v440, %v483
        %485 = vdwg.mxu0
        %v486 = vmax.f32 %v464, 0.0
        %v487 = vmax.f32 %v484, 0.0
        %v488 = vadd.f32 %v486, 0.001
        %v489 = vadd.f32 %v487, 0.001
        %v490 = vld [vmem:[%s323] sm:$0xff]
        %v491 = vld [vmem:[%s323 + $0x8] sm:$0xff]
        %v492 = vld [vmem:[%s323 + $0x10] sm:$0xff]
        %v493 = vld [vmem:[%s323 + $0x18] sm:$0xff]
        %v494 = vperm.slane %v488, 0
        %v495 = vperm.slane %v489, 0
        %v496 = vsub.f32 %v494, %v490
        %v497 = vsub.f32 %v495, %v491
        %v498 = vsub.f32 %v494, %v492
        %v499 = vsub.f32 %v495, %v493
        %v500 = vmul.f32 %v496, 300.0
        %v501 = vmul.f32 %v497, 300.0
        %v502 = vmul.f32 %v498, 300.0
        %v503 = vmul.f32 %v499, 300.0
        %v504 = vmul.f32 %v500, %v496
        %v505 = vmul.f32 %v501, %v497
        %v506 = vmul.f32 %v502, %v498
        %v507 = vmul.f32 %v503, %v499
        %v508 = vadd.f32 %v504, 1.0
        %v509 = vadd.f32 %v505, 1.0
        %v510 = vadd.f32 %v506, 1.0
        %v511 = vadd.f32 %v507, 1.0
        %v512 = vrcp.pop %v508
        %v513 = vrcp.pop %v509
        %v514 = vrcp.pop %v510
        %v515 = vrcp.pop %v511
        %v516 = vmul.f32 %v496, %v512
        %v517 = vmul.f32 %v497, %v513
        %v518 = vmul.f32 %v498, %v514
        %v519 = vmul.f32 %v499, %v515
        %v520 = vadd.f32 %v516, 0.0
        %v521 = vadd.f32 %v517, 0.0
        %v522 = vadd.f32 %v518, 0.0
        %v523 = vadd.f32 %v519, 0.0
        %v524 = vperm.slane %v488, 1
        %v525 = vperm.slane %v489, 1
        %v526 = vsub.f32 %v524, %v490
        %v527 = vsub.f32 %v525, %v491
        %v528 = vsub.f32 %v524, %v492
        %v529 = vsub.f32 %v525, %v493
        %v530 = vmul.f32 %v526, 300.0
        %v531 = vmul.f32 %v527, 300.0
        %v532 = vmul.f32 %v528, 300.0
        %v533 = vmul.f32 %v529, 300.0
        %v534 = vmul.f32 %v530, %v526
        %v535 = vmul.f32 %v531, %v527
        %v536 = vmul.f32 %v532, %v528
        %v537 = vmul.f32 %v533, %v529
        %v538 = vadd.f32 %v534, 1.0
        %v539 = vadd.f32 %v535, 1.0
        %v540 = vadd.f32 %v536, 1.0
        %v541 = vadd.f32 %v537, 1.0
        %v542 = vrcp.pop %v538
        %v543 = vrcp.pop %v539
        %v544 = vrcp.pop %v540
        %v545 = vrcp.pop %v541
        %v546 = vmul.f32 %v526, %v542
        %v547 = vmul.f32 %v527, %v543
        %v548 = vmul.f32 %v528, %v544
        %v549 = vmul.f32 %v529, %v545
        %v550 = vadd.f32 %v520, %v546
        %v551 = vadd.f32 %v521, %v547
        %v552 = vadd.f32 %v522, %v548
        %v553 = vadd.f32 %v523, %v549
        %v554 = vperm.slane %v488, 2
        %v555 = vperm.slane %v489, 2
        %v556 = vsub.f32 %v554, %v490
        %v557 = vsub.f32 %v555, %v491
        %v558 = vsub.f32 %v554, %v492
        %v559 = vsub.f32 %v555, %v493
        %v560 = vmul.f32 %v556, 300.0
        %v561 = vmul.f32 %v557, 300.0
        %v562 = vmul.f32 %v558, 300.0
        %v563 = vmul.f32 %v559, 300.0
        %v564 = vmul.f32 %v560, %v556
        %v565 = vmul.f32 %v561, %v557
        %v566 = vmul.f32 %v562, %v558
        %v567 = vmul.f32 %v563, %v559
        %v568 = vadd.f32 %v564, 1.0
        %v569 = vadd.f32 %v565, 1.0
        %v570 = vadd.f32 %v566, 1.0
        %v571 = vadd.f32 %v567, 1.0
        %v572 = vrcp.pop %v568
        %v573 = vrcp.pop %v569
        %v574 = vrcp.pop %v570
        %v575 = vrcp.pop %v571
        %v576 = vmul.f32 %v556, %v572
        %v577 = vmul.f32 %v557, %v573
        %v578 = vmul.f32 %v558, %v574
        %v579 = vmul.f32 %v559, %v575
        %v580 = vadd.f32 %v550, %v576
        %v581 = vadd.f32 %v551, %v577
        %v582 = vadd.f32 %v552, %v578
        %v583 = vadd.f32 %v553, %v579
        %v584 = vperm.slane %v488, 3
        %v585 = vperm.slane %v489, 3
        %v586 = vsub.f32 %v584, %v490
        %v587 = vsub.f32 %v585, %v491
        %v588 = vsub.f32 %v584, %v492
        %v589 = vsub.f32 %v585, %v493
        %v590 = vmul.f32 %v586, 300.0
        %v591 = vmul.f32 %v587, 300.0
        %v592 = vmul.f32 %v588, 300.0
        %v593 = vmul.f32 %v589, 300.0
        %v594 = vmul.f32 %v590, %v586
        %v595 = vmul.f32 %v591, %v587
        %v596 = vmul.f32 %v592, %v588
        %v597 = vmul.f32 %v593, %v589
        %v598 = vadd.f32 %v594, 1.0
        %v599 = vadd.f32 %v595, 1.0
        %v600 = vadd.f32 %v596, 1.0
        %v601 = vadd.f32 %v597, 1.0
        %v602 = vrcp.pop %v598
        %v603 = vrcp.pop %v599
        %v604 = vrcp.pop %v600
        %v605 = vrcp.pop %v601
        %v606 = vmul.f32 %v586, %v602
        %v607 = vmul.f32 %v587, %v603
        %v608 = vmul.f32 %v588, %v604
        %v609 = vmul.f32 %v589, %v605
        %v610 = vadd.f32 %v580, %v606
        %v611 = vadd.f32 %v581, %v607
        %v612 = vadd.f32 %v582, %v608
        %v613 = vadd.f32 %v583, %v609
        %v614 = vperm.slane %v488, 4
        %v615 = vperm.slane %v489, 4
        %v616 = vsub.f32 %v614, %v490
        %v617 = vsub.f32 %v615, %v491
        %v618 = vsub.f32 %v614, %v492
        %v619 = vsub.f32 %v615, %v493
        %v620 = vmul.f32 %v616, 300.0
        %v621 = vmul.f32 %v617, 300.0
        %v622 = vmul.f32 %v618, 300.0
        %v623 = vmul.f32 %v619, 300.0
        %v624 = vmul.f32 %v620, %v616
        %v625 = vmul.f32 %v621, %v617
        %v626 = vmul.f32 %v622, %v618
        %v627 = vmul.f32 %v623, %v619
        %v628 = vadd.f32 %v624, 1.0
        %v629 = vadd.f32 %v625, 1.0
        %v630 = vadd.f32 %v626, 1.0
        %v631 = vadd.f32 %v627, 1.0
        %v632 = vrcp.pop %v628
        %v633 = vrcp.pop %v629
        %v634 = vrcp.pop %v630
        %v635 = vrcp.pop %v631
        %v636 = vmul.f32 %v616, %v632
        %v637 = vmul.f32 %v617, %v633
        %v638 = vmul.f32 %v618, %v634
        %v639 = vmul.f32 %v619, %v635
        %v640 = vadd.f32 %v610, %v636
        %v641 = vadd.f32 %v611, %v637
        %v642 = vadd.f32 %v612, %v638
        %v643 = vadd.f32 %v613, %v639
        %v644 = vperm.slane %v488, 5
        %v645 = vperm.slane %v489, 5
        %v646 = vsub.f32 %v644, %v490
        %v647 = vsub.f32 %v645, %v491
        %v648 = vsub.f32 %v644, %v492
        %v649 = vsub.f32 %v645, %v493
        %v650 = vmul.f32 %v646, 300.0
        %v651 = vmul.f32 %v647, 300.0
        %v652 = vmul.f32 %v648, 300.0
        %v653 = vmul.f32 %v649, 300.0
        %v654 = vmul.f32 %v650, %v646
        %v655 = vmul.f32 %v651, %v647
        %v656 = vmul.f32 %v652, %v648
        %v657 = vmul.f32 %v653, %v649
        %v658 = vadd.f32 %v654, 1.0
        %v659 = vadd.f32 %v655, 1.0
        %v660 = vadd.f32 %v656, 1.0
        %v661 = vadd.f32 %v657, 1.0
        %v662 = vrcp.pop %v658
        %v663 = vrcp.pop %v659
        %v664 = vrcp.pop %v660
        %v665 = vrcp.pop %v661
        %v666 = vmul.f32 %v646, %v662
        %v667 = vmul.f32 %v647, %v663
        %v668 = vmul.f32 %v648, %v664
        %v669 = vmul.f32 %v649, %v665
        %v670 = vadd.f32 %v640, %v666
        %v671 = vadd.f32 %v641, %v667
        %v672 = vadd.f32 %v642, %v668
        %v673 = vadd.f32 %v643, %v669
        %v674 = vperm.slane %v488, 6
        %v675 = vperm.slane %v489, 6
        %v676 = vsub.f32 %v674, %v490
        %v677 = vsub.f32 %v675, %v491
        %v678 = vsub.f32 %v674, %v492
        %v679 = vsub.f32 %v675, %v493
        %v680 = vmul.f32 %v676, 300.0
        %v681 = vmul.f32 %v677, 300.0
        %v682 = vmul.f32 %v678, 300.0
        %v683 = vmul.f32 %v679, 300.0
        %v684 = vmul.f32 %v680, %v676
        %v685 = vmul.f32 %v681, %v677
        %v686 = vmul.f32 %v682, %v678
        %v687 = vmul.f32 %v683, %v679
        %v688 = vadd.f32 %v684, 1.0
        %v689 = vadd.f32 %v685, 1.0
        %v690 = vadd.f32 %v686, 1.0
        %v691 = vadd.f32 %v687, 1.0
        %v692 = vrcp.pop %v688
        %v693 = vrcp.pop %v689
        %v694 = vrcp.pop %v690
        %v695 = vrcp.pop %v691
        %v696 = vmul.f32 %v676, %v692
        %v697 = vmul.f32 %v677, %v693
        %v698 = vmul.f32 %v678, %v694
        %v699 = vmul.f32 %v679, %v695
        %v700 = vadd.f32 %v670, %v696
        %v701 = vadd.f32 %v671, %v697
        %v702 = vadd.f32 %v672, %v698
        %v703 = vadd.f32 %v673, %v699
        %v704 = vperm.slane %v488, 7
        %v705 = vperm.slane %v489, 7
        %v706 = vsub.f32 %v704, %v490
        %v707 = vsub.f32 %v705, %v491
        %v708 = vsub.f32 %v704, %v492
        %v709 = vsub.f32 %v705, %v493
        %v710 = vmul.f32 %v706, 300.0
        %v711 = vmul.f32 %v707, 300.0
        %v712 = vmul.f32 %v708, 300.0
        %v713 = vmul.f32 %v709, 300.0
        %v714 = vmul.f32 %v710, %v706
        %v715 = vmul.f32 %v711, %v707
        %v716 = vmul.f32 %v712, %v708
        %v717 = vmul.f32 %v713, %v709
        %v718 = vadd.f32 %v714, 1.0
        %v719 = vadd.f32 %v715, 1.0
        %v720 = vadd.f32 %v716, 1.0
        %v721 = vadd.f32 %v717, 1.0
        %v722 = vrcp.pop %v718
        %v723 = vrcp.pop %v719
        %v724 = vrcp.pop %v720
        %v725 = vrcp.pop %v721
        %v726 = vmul.f32 %v706, %v722
        %v727 = vmul.f32 %v707, %v723
        %v728 = vmul.f32 %v708, %v724
        %v729 = vmul.f32 %v709, %v725
        %v730 = vadd.f32 %v700, %v726
        %v731 = vadd.f32 %v701, %v727
        %v732 = vadd.f32 %v702, %v728
        %v733 = vadd.f32 %v703, %v729
        %v734 = vadd.f32 %v490, %v730
        %v735 = vadd.f32 %v491, %v731
        %v736 = vadd.f32 %v492, %v732
        %v737 = vadd.f32 %v493, %v733
        %738 = vst [vmem:[%s313] sm:$0xff] %v734
        %739 = vst [vmem:[%s313 + $0x8] sm:$0xff] %v735
        %740 = vst [vmem:[%s313 + $0x10] sm:$0xff] %v736
        %741 = vst [vmem:[%s313 + $0x18] sm:$0xff] %v737
        %s742 = sand.u32 %s185, 1
        %s743 = scalar_lea.sflag [#allocation4], %s742
        %s744 = sand.u32 %s185, 1
        %s745 = smul.addr %s744, 32
        %s746 = scalar_lea.vmem [#allocation5], %s745
        // Predicated region
        $region49: #{tpu_custom_call.1} parent=43 // pred_check
          %p747 = pneg %p195
        $region50: #{tpu_custom_call.1} parent=43 // pred_check_branch
          %749 = sbr.rel (%p747) target = $region52
        $region51: #{tpu_custom_call.1} parent=43 // pred_region
          %s750 = smul.u32 2, %s28
          %752 = vsyncadd %s743, 0
          %s753 = smul.addr %s27, 4
          %s754 = sadd.s32 %s750, %s753
          %s755 = smul.addr %s754, 8
          %s756 = scalar_lea.hbm %s6, %s755
          %s757 = sshll.u32 %s746, 4
          %s758 = int_to_ptr.vmem [resolvable:$true] %s757
          %s759 = sshll.u32 %s756, 4
          %s760 = int_to_ptr.hbm [resolvable:$true] %s759
          %765 = dma.vmem_to_hbm [thread:$0]  %s758, 512, %s760, %s743, 256, 256, 16
        $region52: #{tpu_custom_call.1} parent=43 // pred_fallthru
          _
      $region44: #{tpu_custom_call.1} parent=5 // pred_fallthru
        _
      %p766 = scmp.le.s32.totalorder 2, %s18
      // Predicated region
      $region53: #{tpu_custom_call.1} parent=5 // pred_check
        %p767 = pneg %p766
      $region54: #{tpu_custom_call.1} parent=5 // pred_check_branch
        %769 = sbr.rel (%p767) target = $region56
      $region55: #{tpu_custom_call.1} parent=5 // pred_region
        %s770 = ssub.s32 %s18, 2
        // Predicated region
        $region57: #{tpu_custom_call.1} parent=55 // pred_check
          %p771 = pneg %p201
        $region58: #{tpu_custom_call.1} parent=55 // pred_check_branch
          %773 = sbr.rel (%p771) target = $region60
        $region59: #{tpu_custom_call.1} parent=55 // pred_region
          %s774 = sand.u32 %s186, 1
          %s775 = scalar_lea.sflag [#allocation4], %s774
          %s776 = sand.u32 %s186, 1
          %s777 = smul.addr %s776, 32
          %s778 = scalar_lea.vmem [#allocation5], %s777
          %780 = dma.done %s775, 512
        $region60: #{tpu_custom_call.1} parent=55 // pred_fallthru
          _
      $region56: #{tpu_custom_call.1} parent=5 // pred_fallthru
        _
    $region6: #{tpu_custom_call.1} parent=1 // loop_footer
      %s22 = sadd.s32 1, %s18
    $region7: #{tpu_custom_call.1} parent=1 // loop_footer_branch
      %17 = sbr.rel target = $region3
    $region8: #{tpu_custom_call.1} parent=1 // loop_exit
      _
    %781 = vsyncpa [#allocation3], 1
    %s782 = scalar_lea.sflag [#allocation3], 1
    %783 = vsyncpa %s782, 1
    %784 = vsyncpa [#allocation4], 1
    %s785 = scalar_lea.sflag [#allocation4], 1
    %786 = vsyncpa %s785, 1

</llo_original>
